<compile_context>
chip_gen: v6e
topology: v6e:2x2x1
jax: 0.10.0
libtpu: 0.0.40
codegen_flags: <defaults>
</compile_context>

<pallas_src>
import numpy as np
import jax
import jax.numpy as jnp
from jax import lax
from jax.experimental import pallas as pl
from jax.experimental.pallas import tpu as pltpu


def _rnn_kernel(x_ref, wih_ref, whh_ref, bias_ref, o_ref):
    """Single invocation; assets folded into the RNN batch.

    x_ref   : (W*A*B, C)  time-major flattened input; rows [t*AB, (t+1)*AB) are x_t
    wih_ref : (C, H)      W_ih^T
    whh_ref : (H, H)      W_hh^T
    bias_ref: (1, H)      b_ih + b_hh (folded once)
    o_ref   : (A*B, W*H)  lane-dense output; columns [t*H, (t+1)*H) hold h_t
    """
    AB, WH = o_ref.shape
    H = whh_ref.shape[0]
    W = WH // H

    # Time-parallel input projection on the MXU: one matmul covering every
    # step, both biases folded in once.  Kept f32 (off the per-step serial
    # chain; accuracy anchor for the recurrence).
    xw = (
        jnp.dot(x_ref[...], wih_ref[...], preferred_element_type=jnp.float32)
        + bias_ref[...]
    )

    # bf16 operands for the recurrence matmul, f32 accumulation: single-pass
    # MXU matmul per step instead of a multi-pass f32 lowering.
    whh_bf = whh_ref[...].astype(jnp.bfloat16)

    # TODO(synk): keep W_hh resident in the MXU weight registers for the whole
    # recurrence (pltpu.matmul_push_rhs once, then matmul_acc_lhs/matmul_pop
    # per step; on v7x accumulate xw_t directly in the MRB to drop the VPU add).
    # Left on jnp.dot here: the explicit MXU-driving ops are not portably
    # lowerable for this tiny 8x32x32 shape across v5e/v6e/v7x.

    h = jnp.zeros((AB, H), jnp.float32)
    # W is small: static full unroll keeps the carried state in vregs with no
    # VMEM round-trip; per-step stores below bound each h_t's live range.
    # TODO(synk): for production W, switch to a time-chunked grid ('arbitrary')
    # with h carried in a pltpu.VMEM scratch zeroed under pl.when(pid==0) and
    # lax.fori_loop(..., unroll=4/8) inside each chunk -- mandatory under
    # v7x's 64 MiB VMEM and gives HBM->VMEM prefetch overlap.
    for t in range(W):
        xw_t = xw[t * AB:(t + 1) * AB, :]   # static, sublane-aligned row slice
        h = jnp.tanh(
            xw_t
            + jnp.dot(h.astype(jnp.bfloat16), whh_bf,
                      preferred_element_type=jnp.float32)
        )
        # Per-step store into the lane-dense output slab: uses the idle vst
        # slot (overlaps the next step's MXU push) and keeps only the current
        # h live in vregs instead of all W hidden states.
        o_ref[:, t * H:(t + 1) * H] = h.astype(o_ref.dtype)


def eiie_recurrent_forward(x, w_ih, w_hh, b_ih, b_hh):
    """x: [B, C, A, W] float32 (NCHW). Returns [B, H, A, W] float32."""
    B, C, A, W = x.shape
    H = w_hh.shape[0]
    AB = A * B

    # Weights are shared across assets -> fold assets into the RNN batch.
    # NCHW [B,C,A,W] -> [W,A,B,C] -> (W*A*B, C).  Flatten wrapper-side so the
    # kernel's MXU operand is already contiguously laid out.
    x_flat = jnp.transpose(x, (3, 2, 0, 1)).reshape(W * AB, C)
    wih_t = jnp.transpose(w_ih)            # (C, H)
    whh_t = jnp.transpose(w_hh)            # (H, H)
    bias = (b_ih + b_hh).reshape(1, H)     # fold both biases once

    # Single invocation, no grid (grid bookkeeping is pure overhead at this
    # size; dimension_semantics on a size-1 grid is a no-op).  Whole arrays in
    # VMEM; output block is lane-dense (W*H = 256, multiple of 128).
    # TODO(synk): for A*B >= 16 on v7x, add a leading 'parallel' grid axis
    # splitting the folded batch across the two TensorCores.
    out2 = pl.pallas_call(
        _rnn_kernel,
        out_shape=jax.ShapeDtypeStruct((AB, W * H), jnp.float32),
        in_specs=[
            pl.BlockSpec(memory_space=pltpu.MemorySpace.VMEM),
            pl.BlockSpec(memory_space=pltpu.MemorySpace.VMEM),
            pl.BlockSpec(memory_space=pltpu.MemorySpace.VMEM),
            pl.BlockSpec(memory_space=pltpu.MemorySpace.VMEM),
        ],
        out_specs=pl.BlockSpec(memory_space=pltpu.MemorySpace.VMEM),
    )(x_flat, wih_t, whh_t, bias)

    # (A*B, W*H) -> (A, B, W, H) -> (B, H, A, W)  (== permute(2,3,0,1) of the
    # stacked [A, W, B, H] in the PyTorch reference); final .view is a no-op.
    out = jnp.transpose(out2.reshape(A, B, W, H), (1, 3, 0, 2))
    return out.reshape(-1, H, A, W)


def eiie_recurrent_reference(x, w_ih, w_hh, b_ih, b_hh):
    """Pure-JAX f32 reference mirroring nn.RNN (tanh, h0 = 0)."""
    B, C, A, W = x.shape
    H = w_hh.shape[0]
    xp = jnp.transpose(x, (2, 3, 0, 1))  # [A, W, B, C]

    def per_asset(xa):
        def step(h, xt):
            h_new = jnp.tanh(xt @ w_ih.T + b_ih + h @ w_hh.T + b_hh)
            return h_new, h_new
        h0 = jnp.zeros((B, H), x.dtype)
        _, hs = lax.scan(step, h0, xa)
        return hs  # (W, B, H)

    outs = jax.vmap(per_asset)(xp)                 # (A, W, B, H)
    out = jnp.transpose(outs, (2, 3, 0, 1))        # (B, H, A, W)
    return out.reshape(-1, H, A, W)


if __name__ == "__main__":
    # shape = (batch, features, assets, window); hidden = layer_conf['neuron_number']
    B, C, A, W = 2, 4, 4, 8
    H = 32

    key = jax.random.PRNGKey(0)
    kx, k1, k2, k3, k4 = jax.random.split(key, 5)

    x = jax.random.normal(kx, (B, C, A, W), dtype=jnp.float32)

    # Deterministic parameter init, matching nn.RNN's uniform(-1/sqrt(H), 1/sqrt(H)).
    bound = 1.0 / np.sqrt(H)
    w_ih = jax.random.uniform(k1, (H, C), jnp.float32, -bound, bound)
    w_hh = jax.random.uniform(k2, (H, H), jnp.float32, -bound, bound)
    b_ih = jax.random.uniform(k3, (H,), jnp.float32, -bound, bound)
    b_hh = jax.random.uniform(k4, (H,), jnp.float32, -bound, bound)

    out = eiie_recurrent_forward(x, w_ih, w_hh, b_ih, b_hh)
    out = jax.block_until_ready(out)

    ref = eiie_recurrent_reference(x, w_ih, w_hh, b_ih, b_hh)
    # Tolerance relaxed vs the pure-f32 reference: the recurrence matmul now
    # uses bf16 operands (f32 accumulation); expected error ~1e-3 over W=8
    # contractive tanh steps.
    np.testing.assert_allclose(np.asarray(out), np.asarray(ref),
                               rtol=2e-2, atol=2e-2)
    assert out.shape == (B, H, A, W)

    print("KERNEL_OK")
</pallas_src>

<mosaic_0001>
module attributes {stable_mosaic.version = 11 : i64} {
  func.func @_rnn_kernel(%arg0: memref<64x4xf32, #tpu.memory_space<vmem>>, %arg1: memref<4x32xf32, #tpu.memory_space<vmem>>, %arg2: memref<32x32xf32, #tpu.memory_space<vmem>>, %arg3: memref<1x32xf32, #tpu.memory_space<vmem>>, %arg4: memref<8x256xf32, #tpu.memory_space<vmem>>) attributes {dimension_semantics = [], scalar_prefetch = 0 : i64, scratch_operands = 0 : i64, tpu.core_type = #tpu.core_type<tc>} {
    %c0 = arith.constant 0 : index
    %c0_0 = arith.constant 0 : index
    %0 = vector.load %arg0[%c0, %c0_0] : memref<64x4xf32, #tpu.memory_space<vmem>>, vector<64x4xf32>
    %c0_1 = arith.constant 0 : index
    %c0_2 = arith.constant 0 : index
    %1 = vector.load %arg1[%c0_1, %c0_2] : memref<4x32xf32, #tpu.memory_space<vmem>>, vector<4x32xf32>
    %cst = arith.constant dense<0.000000e+00> : vector<64x32xf32>
    %2 = tpu.matmul %0, %1, %cst {dimension_numbers = #tpu.dot_dimension_numbers<[1], [0], [0], [1], [0, 0, 1, 1], [], []>} : vector<64x4xf32>, vector<4x32xf32>, vector<64x32xf32> -> vector<64x32xf32>
    %c0_3 = arith.constant 0 : index
    %c0_4 = arith.constant 0 : index
    %3 = vector.load %arg3[%c0_3, %c0_4] : memref<1x32xf32, #tpu.memory_space<vmem>>, vector<1x32xf32>
    %4 = vector.broadcast %3 : vector<1x32xf32> to vector<64x32xf32>
    %5 = arith.addf %2, %4 : vector<64x32xf32>
    %c0_5 = arith.constant 0 : index
    %c0_6 = arith.constant 0 : index
    %6 = vector.load %arg2[%c0_5, %c0_6] : memref<32x32xf32, #tpu.memory_space<vmem>>, vector<32x32xf32>
    %7 = arith.truncf %6 : vector<32x32xf32> to vector<32x32xbf16>
    %cst_7 = arith.constant 0.000000e+00 : f32
    %8 = vector.broadcast %cst_7 : f32 to vector<8x32xf32>
    %9 = vector.extract_strided_slice %5 {offsets = [0, 0], sizes = [8, 32], strides = [1, 1]} : vector<64x32xf32> to vector<8x32xf32>
    %10 = arith.truncf %8 : vector<8x32xf32> to vector<8x32xbf16>
    %cst_8 = arith.constant dense<0.000000e+00> : vector<8x32xf32>
    %11 = tpu.matmul %10, %7, %cst_8 {dimension_numbers = #tpu.dot_dimension_numbers<[1], [0], [0], [1], [0, 0, 1, 1], [], []>} : vector<8x32xbf16>, vector<32x32xbf16>, vector<8x32xf32> -> vector<8x32xf32>
    %12 = arith.addf %9, %11 : vector<8x32xf32>
    %13 = math.tanh %12 : vector<8x32xf32>
    %c0_9 = arith.constant 0 : index
    %c0_10 = arith.constant 0 : index
    %14 = vector.load %arg4[%c0_9, %c0_10] : memref<8x256xf32, #tpu.memory_space<vmem>>, vector<8x32xf32>
    tpu.vector_store %arg4[%c0_9, %c0_10], %13 {strides = array<i32>} : memref<8x256xf32, #tpu.memory_space<vmem>>, vector<8x32xf32>,
    %15 = vector.extract_strided_slice %5 {offsets = [8, 0], sizes = [8, 32], strides = [1, 1]} : vector<64x32xf32> to vector<8x32xf32>
    %16 = arith.truncf %13 : vector<8x32xf32> to vector<8x32xbf16>
    %cst_11 = arith.constant dense<0.000000e+00> : vector<8x32xf32>
    %17 = tpu.matmul %16, %7, %cst_11 {dimension_numbers = #tpu.dot_dimension_numbers<[1], [0], [0], [1], [0, 0, 1, 1], [], []>} : vector<8x32xbf16>, vector<32x32xbf16>, vector<8x32xf32> -> vector<8x32xf32>
    %18 = arith.addf %15, %17 : vector<8x32xf32>
    %19 = math.tanh %18 : vector<8x32xf32>
    %c0_12 = arith.constant 0 : index
    %c32 = arith.constant 32 : index
    %20 = vector.load %arg4[%c0_12, %c32] : memref<8x256xf32, #tpu.memory_space<vmem>>, vector<8x32xf32>
    tpu.vector_store %arg4[%c0_12, %c32], %19 {strides = array<i32>} : memref<8x256xf32, #tpu.memory_space<vmem>>, vector<8x32xf32>,
    %21 = vector.extract_strided_slice %5 {offsets = [16, 0], sizes = [8, 32], strides = [1, 1]} : vector<64x32xf32> to vector<8x32xf32>
    %22 = arith.truncf %19 : vector<8x32xf32> to vector<8x32xbf16>
    %cst_13 = arith.constant dense<0.000000e+00> : vector<8x32xf32>
    %23 = tpu.matmul %22, %7, %cst_13 {dimension_numbers = #tpu.dot_dimension_numbers<[1], [0], [0], [1], [0, 0, 1, 1], [], []>} : vector<8x32xbf16>, vector<32x32xbf16>, vector<8x32xf32> -> vector<8x32xf32>
    %24 = arith.addf %21, %23 : vector<8x32xf32>
    %25 = math.tanh %24 : vector<8x32xf32>
    %c0_14 = arith.constant 0 : index
    %c64 = arith.constant 64 : index
    %26 = vector.load %arg4[%c0_14, %c64] : memref<8x256xf32, #tpu.memory_space<vmem>>, vector<8x32xf32>
    tpu.vector_store %arg4[%c0_14, %c64], %25 {strides = array<i32>} : memref<8x256xf32, #tpu.memory_space<vmem>>, vector<8x32xf32>,
    %27 = vector.extract_strided_slice %5 {offsets = [24, 0], sizes = [8, 32], strides = [1, 1]} : vector<64x32xf32> to vector<8x32xf32>
    %28 = arith.truncf %25 : vector<8x32xf32> to vector<8x32xbf16>
    %cst_15 = arith.constant dense<0.000000e+00> : vector<8x32xf32>
    %29 = tpu.matmul %28, %7, %cst_15 {dimension_numbers = #tpu.dot_dimension_numbers<[1], [0], [0], [1], [0, 0, 1, 1], [], []>} : vector<8x32xbf16>, vector<32x32xbf16>, vector<8x32xf32> -> vector<8x32xf32>
    %30 = arith.addf %27, %29 : vector<8x32xf32>
    %31 = math.tanh %30 : vector<8x32xf32>
    %c0_16 = arith.constant 0 : index
    %c96 = arith.constant 96 : index
    %32 = vector.load %arg4[%c0_16, %c96] : memref<8x256xf32, #tpu.memory_space<vmem>>, vector<8x32xf32>
    tpu.vector_store %arg4[%c0_16, %c96], %31 {strides = array<i32>} : memref<8x256xf32, #tpu.memory_space<vmem>>, vector<8x32xf32>,
    %33 = vector.extract_strided_slice %5 {offsets = [32, 0], sizes = [8, 32], strides = [1, 1]} : vector<64x32xf32> to vector<8x32xf32>
    %34 = arith.truncf %31 : vector<8x32xf32> to vector<8x32xbf16>
    %cst_17 = arith.constant dense<0.000000e+00> : vector<8x32xf32>
    %35 = tpu.matmul %34, %7, %cst_17 {dimension_numbers = #tpu.dot_dimension_numbers<[1], [0], [0], [1], [0, 0, 1, 1], [], []>} : vector<8x32xbf16>, vector<32x32xbf16>, vector<8x32xf32> -> vector<8x32xf32>
    %36 = arith.addf %33, %35 : vector<8x32xf32>
    %37 = math.tanh %36 : vector<8x32xf32>
    %c0_18 = arith.constant 0 : index
    %c128 = arith.constant 128 : index
    %38 = vector.load %arg4[%c0_18, %c128] : memref<8x256xf32, #tpu.memory_space<vmem>>, vector<8x32xf32>
    tpu.vector_store %arg4[%c0_18, %c128], %37 {strides = array<i32>} : memref<8x256xf32, #tpu.memory_space<vmem>>, vector<8x32xf32>,
    %39 = vector.extract_strided_slice %5 {offsets = [40, 0], sizes = [8, 32], strides = [1, 1]} : vector<64x32xf32> to vector<8x32xf32>
    %40 = arith.truncf %37 : vector<8x32xf32> to vector<8x32xbf16>
    %cst_19 = arith.constant dense<0.000000e+00> : vector<8x32xf32>
    %41 = tpu.matmul %40, %7, %cst_19 {dimension_numbers = #tpu.dot_dimension_numbers<[1], [0], [0], [1], [0, 0, 1, 1], [], []>} : vector<8x32xbf16>, vector<32x32xbf16>, vector<8x32xf32> -> vector<8x32xf32>
    %42 = arith.addf %39, %41 : vector<8x32xf32>
    %43 = math.tanh %42 : vector<8x32xf32>
    %c0_20 = arith.constant 0 : index
    %c160 = arith.constant 160 : index
    %44 = vector.load %arg4[%c0_20, %c160] : memref<8x256xf32, #tpu.memory_space<vmem>>, vector<8x32xf32>
    tpu.vector_store %arg4[%c0_20, %c160], %43 {strides = array<i32>} : memref<8x256xf32, #tpu.memory_space<vmem>>, vector<8x32xf32>,
    %45 = vector.extract_strided_slice %5 {offsets = [48, 0], sizes = [8, 32], strides = [1, 1]} : vector<64x32xf32> to vector<8x32xf32>
    %46 = arith.truncf %43 : vector<8x32xf32> to vector<8x32xbf16>
    %cst_21 = arith.constant dense<0.000000e+00> : vector<8x32xf32>
    %47 = tpu.matmul %46, %7, %cst_21 {dimension_numbers = #tpu.dot_dimension_numbers<[1], [0], [0], [1], [0, 0, 1, 1], [], []>} : vector<8x32xbf16>, vector<32x32xbf16>, vector<8x32xf32> -> vector<8x32xf32>
    %48 = arith.addf %45, %47 : vector<8x32xf32>
    %49 = math.tanh %48 : vector<8x32xf32>
    %c0_22 = arith.constant 0 : index
    %c192 = arith.constant 192 : index
    %50 = vector.load %arg4[%c0_22, %c192] : memref<8x256xf32, #tpu.memory_space<vmem>>, vector<8x32xf32>
    tpu.vector_store %arg4[%c0_22, %c192], %49 {strides = array<i32>} : memref<8x256xf32, #tpu.memory_space<vmem>>, vector<8x32xf32>,
    %51 = vector.extract_strided_slice %5 {offsets = [56, 0], sizes = [8, 32], strides = [1, 1]} : vector<64x32xf32> to vector<8x32xf32>
    %52 = arith.truncf %49 : vector<8x32xf32> to vector<8x32xbf16>
    %cst_23 = arith.constant dense<0.000000e+00> : vector<8x32xf32>
    %53 = tpu.matmul %52, %7, %cst_23 {dimension_numbers = #tpu.dot_dimension_numbers<[1], [0], [0], [1], [0, 0, 1, 1], [], []>} : vector<8x32xbf16>, vector<32x32xbf16>, vector<8x32xf32> -> vector<8x32xf32>
    %54 = arith.addf %51, %53 : vector<8x32xf32>
    %55 = math.tanh %54 : vector<8x32xf32>
    %c0_24 = arith.constant 0 : index
    %c224 = arith.constant 224 : index
    %56 = vector.load %arg4[%c0_24, %c224] : memref<8x256xf32, #tpu.memory_space<vmem>>, vector<8x32xf32>
    tpu.vector_store %arg4[%c0_24, %c224], %55 {strides = array<i32>} : memref<8x256xf32, #tpu.memory_space<vmem>>, vector<8x32xf32>,
    return
  }
}

</mosaic_0001>

<llo_original>
// kernel: tpu_custom_call.1
$region0: #{tpu_custom_call.1}
  #allocation0 [shape = 'u32[]', space=smem, size = 0x4, offset = 0x4, fixed_abs, tag = 'smem constant byte address 0x4 - core index']
  #allocation1 [shape = 'u32[144,128]{1,0:T(1,128)}', space=vmem, size = 0x12000, scoped, tag = 'internal scratch']
  %s0 = inlined_call_operand.vmem [shape: f32[64,4], index: 0, kind: input, shape index: {}]
  %s1 = inlined_call_operand.vmem [shape: f32[4,32], index: 1, kind: input, shape index: {}]
  %s2 = inlined_call_operand.vmem [shape: f32[32,32], index: 2, kind: input, shape index: {}]
  %s3 = inlined_call_operand.vmem [shape: f32[1,32], index: 3, kind: input, shape index: {}]
  %s4 = inlined_call_operand.hbm [shape: f32[8,256], index: 4, kind: output, shape index: {}]
  %s5 = sld [smem:[#allocation0]]
  $region26: #{tpu_custom_call.1} parent=0
    _
  %s7 = ssub.s32 1, %s5
  %s8 = scalar_select 0, %s7, %s5
  $region1: #{tpu_custom_call.1} parent=0
    #allocation2 [shape = 'u8[8192]{0}', space=vmem, size = 0x2000, scoped, tag = 'output window, operand 0, single buffered']
    #allocation3 [shape = 's32[1]{0}', space=sflag, size = 0x4, scoped, tag = 'scoped memory for tpu_custom_call.1']
    %9 = vsyncpa [#allocation3], 0
    // Predicated region
    $region2: #{tpu_custom_call.1} parent=1 // pred_check
      _
    $region3: #{tpu_custom_call.1} parent=1 // pred_check_branch
      %11 = sbr.rel (0) target = $region5
    $region4: #{tpu_custom_call.1} parent=1 // pred_region
      _
    $region5: #{tpu_custom_call.1} parent=1 // pred_fallthru
      _
    // Predicated region
    $region6: #{tpu_custom_call.1} parent=1 // pred_check
      _
    $region7: #{tpu_custom_call.1} parent=1 // pred_check_branch
      %13 = sbr.rel (0) target = $region9
    $region8: #{tpu_custom_call.1} parent=1 // pred_region
      _
    $region9: #{tpu_custom_call.1} parent=1 // pred_fallthru
      _
    // Predicated region
    $region10: #{tpu_custom_call.1} parent=1 // pred_check
      _
    $region11: #{tpu_custom_call.1} parent=1 // pred_check_branch
      %15 = sbr.rel (0) target = $region13
    $region12: #{tpu_custom_call.1} parent=1 // pred_region
      _
    $region13: #{tpu_custom_call.1} parent=1 // pred_fallthru
      _
    // Predicated region
    $region14: #{tpu_custom_call.1} parent=1 // pred_check
      _
    $region15: #{tpu_custom_call.1} parent=1 // pred_check_branch
      %17 = sbr.rel (0) target = $region17
    $region16: #{tpu_custom_call.1} parent=1 // pred_region
      _
    $region17: #{tpu_custom_call.1} parent=1 // pred_fallthru
      _
    %v19 = vld [vmem:[%s0] sm:$0xff]
    %v20 = vld [vmem:[%s0 + $0x8] sm:$0xff]
    %v21 = vld [vmem:[%s0 + $0x10] sm:$0xff]
    %v22 = vld [vmem:[%s0 + $0x18] sm:$0xff]
    %v23 = vld [vmem:[%s0 + $0x20] sm:$0xff]
    %v24 = vld [vmem:[%s0 + $0x28] sm:$0xff]
    %v25 = vld [vmem:[%s0 + $0x30] sm:$0xff]
    %v26 = vld [vmem:[%s0 + $0x38] sm:$0xff]
    %v27 = vld [vmem:[%s1] sm:$0xf]
    %v28 = vld [vmem:[%s3] sm:$0x1]
    %v30 = vlaneseq
    %v31 = vshrl.u32 %v30, 7
    %v32 = vsub.s32 0, %v31
    %v33 = vrot.slane %v28, %v32
    %vm35 = vcmask 31744
    %v37 = vsel %vm35, %v19, 0
    %v40 = vsel %vm35, %v20, 0
    %v43 = vsel %vm35, %v21, 0
    %v46 = vsel %vm35, %v22, 0
    %v49 = vsel %vm35, %v23, 0
    %v52 = vsel %vm35, %v24, 0
    %v55 = vsel %vm35, %v25, 0
    %v58 = vsel %vm35, %v26, 0
    %vm60 = vcmask 1043456
    %v62 = vsel %vm60, %v27, 0
    %64 = vmatprep.subr.mxu0 0.0
    %65 = vmatpush1.msra.mxu0 0.0
    %66 = vmatprep.subr.mxu0 0.0
    %67 = vmatpush1.msra.mxu0 0.0
    %68 = vmatprep.subr.mxu0 0.0
    %69 = vmatpush1.msra.mxu0 0.0
    %70 = vmatprep.subr.mxu0 0.0
    %71 = vmatpush1.msra.mxu0 0.0
    %72 = vmatprep.subr.mxu0 0.0
    %73 = vmatpush1.msra.mxu0 0.0
    %74 = vmatprep.subr.mxu0 0.0
    %75 = vmatpush1.msra.mxu0 0.0
    %76 = vmatprep.subr.mxu0 0.0
    %77 = vmatpush1.msra.mxu0 0.0
    %78 = vmatprep.subr.mxu0 0.0
    %79 = vmatpush1.msra.mxu0 0.0
    %80 = vmatprep.subr.mxu0 0.0
    %81 = vmatpush1.msra.mxu0 0.0
    %82 = vmatprep.subr.mxu0 0.0
    %83 = vmatpush1.msra.mxu0 0.0
    %84 = vmatprep.subr.mxu0 0.0
    %85 = vmatpush1.msra.mxu0 0.0
    %86 = vmatprep.subr.mxu0 0.0
    %87 = vmatpush1.msra.mxu0 0.0
    %88 = vmatprep.subr.mxu0 0.0
    %89 = vmatpush1.msra.mxu0 0.0
    %90 = vmatprep.subr.mxu0 0.0
    %91 = vmatpush1.msra.mxu0 0.0
    %92 = vmatprep.subr.mxu0 0.0
    %93 = vmatpush1.msra.mxu0 0.0
    %94 = vmatprep.subr.mxu0 0.0
    %95 = vmatpush1.msra.mxu0 %v62
    %96 = vmatprep.subr.mxu0 0.0
    %97 = vmatpush2.msra.mxu0 0.0
    %98 = vmatprep.subr.mxu0 0.0
    %99 = vmatpush2.msra.mxu0 0.0
    %100 = vmatprep.subr.mxu0 0.0
    %101 = vmatpush2.msra.mxu0 0.0
    %102 = vmatprep.subr.mxu0 0.0
    %103 = vmatpush2.msra.mxu0 0.0
    %104 = vmatprep.subr.mxu0 0.0
    %105 = vmatpush2.msra.mxu0 0.0
    %106 = vmatprep.subr.mxu0 0.0
    %107 = vmatpush2.msra.mxu0 0.0
    %108 = vmatprep.subr.mxu0 0.0
    %109 = vmatpush2.msra.mxu0 0.0
    %110 = vmatprep.subr.mxu0 0.0
    %111 = vmatpush2.msra.mxu0 0.0
    %112 = vmatprep.subr.mxu0 0.0
    %113 = vmatpush2.msra.mxu0 0.0
    %114 = vmatprep.subr.mxu0 0.0
    %115 = vmatpush2.msra.mxu0 0.0
    %116 = vmatprep.subr.mxu0 0.0
    %117 = vmatpush2.msra.mxu0 0.0
    %118 = vmatprep.subr.mxu0 0.0
    %119 = vmatpush2.msra.mxu0 0.0
    %120 = vmatprep.subr.mxu0 0.0
    %121 = vmatpush2.msra.mxu0 0.0
    %122 = vmatprep.subr.mxu0 0.0
    %123 = vmatpush2.msra.mxu0 0.0
    %124 = vmatprep.subr.mxu0 0.0
    %125 = vmatpush2.msra.mxu0 0.0
    %126 = vmatprep.subr.mxu0 0.0
    %127 = vmatpush2.msra.mxu0 0.0
    %128 = vmatprep.mubr.f32.mxu0 0.0
    %129 = vmatmul.mubr.f32.gmra.mxu0 %v37
    %v130 = vpop.f32.mrf.mxu0
    %v131 = vadd.f32 %v33, %v130
    %v132 = vpop.f32.mrf.mxu0
    %133 = vmatprep.mubr.f32.mxu0 0.0
    %134 = vmatmul.mubr.f32.gmra.mxu0 %v40
    %v135 = vpop.f32.mrf.mxu0
    %v136 = vadd.f32 %v33, %v135
    %v137 = vpop.f32.mrf.mxu0
    %138 = vmatprep.mubr.f32.mxu0 0.0
    %139 = vmatmul.mubr.f32.gmra.mxu0 %v43
    %v140 = vpop.f32.mrf.mxu0
    %v141 = vadd.f32 %v33, %v140
    %v142 = vpop.f32.mrf.mxu0
    %143 = vmatprep.mubr.f32.mxu0 0.0
    %144 = vmatmul.mubr.f32.gmra.mxu0 %v46
    %v145 = vpop.f32.mrf.mxu0
    %v146 = vadd.f32 %v33, %v145
    %v147 = vpop.f32.mrf.mxu0
    %148 = vmatprep.mubr.f32.mxu0 0.0
    %149 = vmatmul.mubr.f32.gmra.mxu0 %v49
    %v150 = vpop.f32.mrf.mxu0
    %v151 = vadd.f32 %v33, %v150
    %v152 = vpop.f32.mrf.mxu0
    %153 = vmatprep.mubr.f32.mxu0 0.0
    %154 = vmatmul.mubr.f32.gmra.mxu0 %v52
    %v155 = vpop.f32.mrf.mxu0
    %v156 = vadd.f32 %v33, %v155
    %v157 = vpop.f32.mrf.mxu0
    %158 = vmatprep.mubr.f32.mxu0 0.0
    %159 = vmatmul.mubr.f32.gmra.mxu0 %v55
    %v160 = vpop.f32.mrf.mxu0
    %v161 = vadd.f32 %v33, %v160
    %v162 = vpop.f32.mrf.mxu0
    %163 = vmatprep.mubr.f32.mxu0 0.0
    %164 = vmatmul.mubr.f32.gmra.mxu0 %v58
    %v165 = vpop.f32.mrf.mxu0
    %v166 = vadd.f32 %v33, %v165
    %v167 = vpop.f32.mrf.mxu0
    %168 = vdwg.mxu0
    %v169 = vld [vmem:[%s2] sm:$0xff]
    %v170 = vld [vmem:[%s2 + $0x8] sm:$0xff]
    %v171 = vld [vmem:[%s2 + $0x10] sm:$0xff]
    %v172 = vld [vmem:[%s2 + $0x18] sm:$0xff]
    %v173 = vpack.c.bf16 %v170, %v169
    %v174 = vpack.c.bf16 %v172, %v171
    %vm175 = vcmask 261120
    %v177 = vsel %vm175, 0, 0
    %179 = vmatprep.subr.bf16.mxu0 0
    %180 = vmatpush1.bf16.msra.mxu0 0
    %181 = vmatprep.subr.bf16.mxu0 0
    %182 = vmatpush1.bf16.msra.mxu0 0
    %183 = vmatprep.subr.bf16.mxu0 0
    %184 = vmatpush1.bf16.msra.mxu0 0
    %185 = vmatprep.subr.bf16.mxu0 0
    %186 = vmatpush1.bf16.msra.mxu0 0
    %187 = vmatprep.subr.bf16.mxu0 0
    %188 = vmatpush1.bf16.msra.mxu0 0
    %189 = vmatprep.subr.bf16.mxu0 0
    %190 = vmatpush1.bf16.msra.mxu0 0
    %191 = vmatprep.subr.bf16.mxu0 0
    %192 = vmatpush1.bf16.msra.mxu0 %v174
    %193 = vmatprep.subr.bf16.mxu0 0
    %194 = vmatpush1.bf16.msra.mxu0 %v173
    %195 = vmatprep.subr.bf16.mxu0 0
    %196 = vmatpush2.bf16.msra.mxu0 0
    %197 = vmatprep.subr.bf16.mxu0 0
    %198 = vmatpush2.bf16.msra.mxu0 0
    %199 = vmatprep.subr.bf16.mxu0 0
    %200 = vmatpush2.bf16.msra.mxu0 0
    %201 = vmatprep.subr.bf16.mxu0 0
    %202 = vmatpush2.bf16.msra.mxu0 0
    %203 = vmatprep.subr.bf16.mxu0 0
    %204 = vmatpush2.bf16.msra.mxu0 0
    %205 = vmatprep.subr.bf16.mxu0 0
    %206 = vmatpush2.bf16.msra.mxu0 0
    %207 = vmatprep.subr.bf16.mxu0 0
    %208 = vmatpush2.bf16.msra.mxu0 0
    %209 = vmatprep.subr.bf16.mxu0 0
    %210 = vmatpush2.bf16.msra.mxu0 0
    %211 = vmatprep.mubr.bf16.mxu0 0
    %212 = vmatmul.mubr.bf16.gmra.mxu0 %v177
    %v213 = vpop.f32.mrf.mxu0
    %v214 = vadd.f32 0.0, %v213
    %v215 = vpop.f32.mrf.mxu0
    %v216 = vpop.f32.mrf.mxu0
    %v217 = vpop.f32.mrf.mxu0
    %218 = vdwg.mxu0
    %v219 = vadd.f32 %v131, %v214
    %v220 = vtanh.pop %v219
    %221 = vst.msk [vmem:[#allocation2] sm:$0xff] %vm175, %v220
    %v222 = vpack.c.bf16 %v220, %v220
    %v224 = vsel %vm175, %v222, 0
    %226 = vmatprep.subr.bf16.mxu0 0
    %227 = vmatpush1.bf16.msra.mxu0 0
    %228 = vmatprep.subr.bf16.mxu0 0
    %229 = vmatpush1.bf16.msra.mxu0 0
    %230 = vmatprep.subr.bf16.mxu0 0
    %231 = vmatpush1.bf16.msra.mxu0 0
    %232 = vmatprep.subr.bf16.mxu0 0
    %233 = vmatpush1.bf16.msra.mxu0 0
    %234 = vmatprep.subr.bf16.mxu0 0
    %235 = vmatpush1.bf16.msra.mxu0 0
    %236 = vmatprep.subr.bf16.mxu0 0
    %237 = vmatpush1.bf16.msra.mxu0 0
    %238 = vmatprep.subr.bf16.mxu0 0
    %239 = vmatpush1.bf16.msra.mxu0 %v174
    %240 = vmatprep.subr.bf16.mxu0 0
    %241 = vmatpush1.bf16.msra.mxu0 %v173
    %242 = vmatprep.subr.bf16.mxu0 0
    %243 = vmatpush2.bf16.msra.mxu0 0
    %244 = vmatprep.subr.bf16.mxu0 0
    %245 = vmatpush2.bf16.msra.mxu0 0
    %246 = vmatprep.subr.bf16.mxu0 0
    %247 = vmatpush2.bf16.msra.mxu0 0
    %248 = vmatprep.subr.bf16.mxu0 0
    %249 = vmatpush2.bf16.msra.mxu0 0
    %250 = vmatprep.subr.bf16.mxu0 0
    %251 = vmatpush2.bf16.msra.mxu0 0
    %252 = vmatprep.subr.bf16.mxu0 0
    %253 = vmatpush2.bf16.msra.mxu0 0
    %254 = vmatprep.subr.bf16.mxu0 0
    %255 = vmatpush2.bf16.msra.mxu0 0
    %256 = vmatprep.subr.bf16.mxu0 0
    %257 = vmatpush2.bf16.msra.mxu0 0
    %258 = vmatprep.mubr.bf16.mxu0 0
    %259 = vmatmul.mubr.bf16.gmra.mxu0 %v224
    %v260 = vpop.f32.mrf.mxu0
    %v261 = vadd.f32 0.0, %v260
    %v262 = vpop.f32.mrf.mxu0
    %v263 = vpop.f32.mrf.mxu0
    %v264 = vpop.f32.mrf.mxu0
    %265 = vdwg.mxu0
    %v266 = vadd.f32 %v136, %v261
    %v267 = vtanh.pop %v266
    %269 = vrot.lane.b32.xlu0 %v267, 32
    %v270 = vpop.permute.xlu0 %269
    %vm272 = vcmask 523520
    %273 = vst.msk [vmem:[#allocation2] sm:$0xff] %vm272, %v270
    %v274 = vpack.c.bf16 %v267, %v267
    %v276 = vsel %vm175, %v274, 0
    %278 = vmatprep.subr.bf16.mxu0 0
    %279 = vmatpush1.bf16.msra.mxu0 0
    %280 = vmatprep.subr.bf16.mxu0 0
    %281 = vmatpush1.bf16.msra.mxu0 0
    %282 = vmatprep.subr.bf16.mxu0 0
    %283 = vmatpush1.bf16.msra.mxu0 0
    %284 = vmatprep.subr.bf16.mxu0 0
    %285 = vmatpush1.bf16.msra.mxu0 0
    %286 = vmatprep.subr.bf16.mxu0 0
    %287 = vmatpush1.bf16.msra.mxu0 0
    %288 = vmatprep.subr.bf16.mxu0 0
    %289 = vmatpush1.bf16.msra.mxu0 0
    %290 = vmatprep.subr.bf16.mxu0 0
    %291 = vmatpush1.bf16.msra.mxu0 %v174
    %292 = vmatprep.subr.bf16.mxu0 0
    %293 = vmatpush1.bf16.msra.mxu0 %v173
    %294 = vmatprep.subr.bf16.mxu0 0
    %295 = vmatpush2.bf16.msra.mxu0 0
    %296 = vmatprep.subr.bf16.mxu0 0
    %297 = vmatpush2.bf16.msra.mxu0 0
    %298 = vmatprep.subr.bf16.mxu0 0
    %299 = vmatpush2.bf16.msra.mxu0 0
    %300 = vmatprep.subr.bf16.mxu0 0
    %301 = vmatpush2.bf16.msra.mxu0 0
    %302 = vmatprep.subr.bf16.mxu0 0
    %303 = vmatpush2.bf16.msra.mxu0 0
    %304 = vmatprep.subr.bf16.mxu0 0
    %305 = vmatpush2.bf16.msra.mxu0 0
    %306 = vmatprep.subr.bf16.mxu0 0
    %307 = vmatpush2.bf16.msra.mxu0 0
    %308 = vmatprep.subr.bf16.mxu0 0
    %309 = vmatpush2.bf16.msra.mxu0 0
    %310 = vmatprep.mubr.bf16.mxu0 0
    %311 = vmatmul.mubr.bf16.gmra.mxu0 %v276
    %v312 = vpop.f32.mrf.mxu0
    %v313 = vadd.f32 0.0, %v312
    %v314 = vpop.f32.mrf.mxu0
    %v315 = vpop.f32.mrf.mxu0
    %v316 = vpop.f32.mrf.mxu0
    %317 = vdwg.mxu0
    %v318 = vadd.f32 %v141, %v313
    %v319 = vtanh.pop %v318
    %321 = vrot.lane.b32.xlu0 %v319, 64
    %v322 = vpop.permute.xlu0 %321
    %vm324 = vcmask 785920
    %325 = vst.msk [vmem:[#allocation2] sm:$0xff] %vm324, %v322
    %v326 = vpack.c.bf16 %v319, %v319
    %v328 = vsel %vm175, %v326, 0
    %330 = vmatprep.subr.bf16.mxu0 0
    %331 = vmatpush1.bf16.msra.mxu0 0
    %332 = vmatprep.subr.bf16.mxu0 0
    %333 = vmatpush1.bf16.msra.mxu0 0
    %334 = vmatprep.subr.bf16.mxu0 0
    %335 = vmatpush1.bf16.msra.mxu0 0
    %336 = vmatprep.subr.bf16.mxu0 0
    %337 = vmatpush1.bf16.msra.mxu0 0
    %338 = vmatprep.subr.bf16.mxu0 0
    %339 = vmatpush1.bf16.msra.mxu0 0
    %340 = vmatprep.subr.bf16.mxu0 0
    %341 = vmatpush1.bf16.msra.mxu0 0
    %342 = vmatprep.subr.bf16.mxu0 0
    %343 = vmatpush1.bf16.msra.mxu0 %v174
    %344 = vmatprep.subr.bf16.mxu0 0
    %345 = vmatpush1.bf16.msra.mxu0 %v173
    %346 = vmatprep.subr.bf16.mxu0 0
    %347 = vmatpush2.bf16.msra.mxu0 0
    %348 = vmatprep.subr.bf16.mxu0 0
    %349 = vmatpush2.bf16.msra.mxu0 0
    %350 = vmatprep.subr.bf16.mxu0 0
    %351 = vmatpush2.bf16.msra.mxu0 0
    %352 = vmatprep.subr.bf16.mxu0 0
    %353 = vmatpush2.bf16.msra.mxu0 0
    %354 = vmatprep.subr.bf16.mxu0 0
    %355 = vmatpush2.bf16.msra.mxu0 0
    %356 = vmatprep.subr.bf16.mxu0 0
    %357 = vmatpush2.bf16.msra.mxu0 0
    %358 = vmatprep.subr.bf16.mxu0 0
    %359 = vmatpush2.bf16.msra.mxu0 0
    %360 = vmatprep.subr.bf16.mxu0 0
    %361 = vmatpush2.bf16.msra.mxu0 0
    %362 = vmatprep.mubr.bf16.mxu0 0
    %363 = vmatmul.mubr.bf16.gmra.mxu0 %v328
    %v364 = vpop.f32.mrf.mxu0
    %v365 = vadd.f32 0.0, %v364
    %v366 = vpop.f32.mrf.mxu0
    %v367 = vpop.f32.mrf.mxu0
    %v368 = vpop.f32.mrf.mxu0
    %369 = vdwg.mxu0
    %v370 = vadd.f32 %v146, %v365
    %v371 = vtanh.pop %v370
    %373 = vrot.lane.b32.xlu0 %v371, 96
    %v374 = vpop.permute.xlu0 %373
    %vm376 = vcmask 1048320
    %377 = vst.msk [vmem:[#allocation2] sm:$0xff] %vm376, %v374
    %v378 = vpack.c.bf16 %v371, %v371
    %v380 = vsel %vm175, %v378, 0
    %382 = vmatprep.subr.bf16.mxu0 0
    %383 = vmatpush1.bf16.msra.mxu0 0
    %384 = vmatprep.subr.bf16.mxu0 0
    %385 = vmatpush1.bf16.msra.mxu0 0
    %386 = vmatprep.subr.bf16.mxu0 0
    %387 = vmatpush1.bf16.msra.mxu0 0
    %388 = vmatprep.subr.bf16.mxu0 0
    %389 = vmatpush1.bf16.msra.mxu0 0
    %390 = vmatprep.subr.bf16.mxu0 0
    %391 = vmatpush1.bf16.msra.mxu0 0
    %392 = vmatprep.subr.bf16.mxu0 0
    %393 = vmatpush1.bf16.msra.mxu0 0
    %394 = vmatprep.subr.bf16.mxu0 0
    %395 = vmatpush1.bf16.msra.mxu0 %v174
    %396 = vmatprep.subr.bf16.mxu0 0
    %397 = vmatpush1.bf16.msra.mxu0 %v173
    %398 = vmatprep.subr.bf16.mxu0 0
    %399 = vmatpush2.bf16.msra.mxu0 0
    %400 = vmatprep.subr.bf16.mxu0 0
    %401 = vmatpush2.bf16.msra.mxu0 0
    %402 = vmatprep.subr.bf16.mxu0 0
    %403 = vmatpush2.bf16.msra.mxu0 0
    %404 = vmatprep.subr.bf16.mxu0 0
    %405 = vmatpush2.bf16.msra.mxu0 0
    %406 = vmatprep.subr.bf16.mxu0 0
    %407 = vmatpush2.bf16.msra.mxu0 0
    %408 = vmatprep.subr.bf16.mxu0 0
    %409 = vmatpush2.bf16.msra.mxu0 0
    %410 = vmatprep.subr.bf16.mxu0 0
    %411 = vmatpush2.bf16.msra.mxu0 0
    %412 = vmatprep.subr.bf16.mxu0 0
    %413 = vmatpush2.bf16.msra.mxu0 0
    %414 = vmatprep.mubr.bf16.mxu0 0
    %415 = vmatmul.mubr.bf16.gmra.mxu0 %v380
    %v416 = vpop.f32.mrf.mxu0
    %v417 = vadd.f32 0.0, %v416
    %v418 = vpop.f32.mrf.mxu0
    %v419 = vpop.f32.mrf.mxu0
    %v420 = vpop.f32.mrf.mxu0
    %421 = vdwg.mxu0
    %v422 = vadd.f32 %v151, %v417
    %v423 = vtanh.pop %v422
    %424 = vst.msk [vmem:[#allocation2 + $0x8] sm:$0xff] %vm175, %v423
    %v425 = vpack.c.bf16 %v423, %v423
    %v427 = vsel %vm175, %v425, 0
    %429 = vmatprep.subr.bf16.mxu0 0
    %430 = vmatpush1.bf16.msra.mxu0 0
    %431 = vmatprep.subr.bf16.mxu0 0
    %432 = vmatpush1.bf16.msra.mxu0 0
    %433 = vmatprep.subr.bf16.mxu0 0
    %434 = vmatpush1.bf16.msra.mxu0 0
    %435 = vmatprep.subr.bf16.mxu0 0
    %436 = vmatpush1.bf16.msra.mxu0 0
    %437 = vmatprep.subr.bf16.mxu0 0
    %438 = vmatpush1.bf16.msra.mxu0 0
    %439 = vmatprep.subr.bf16.mxu0 0
    %440 = vmatpush1.bf16.msra.mxu0 0
    %441 = vmatprep.subr.bf16.mxu0 0
    %442 = vmatpush1.bf16.msra.mxu0 %v174
    %443 = vmatprep.subr.bf16.mxu0 0
    %444 = vmatpush1.bf16.msra.mxu0 %v173
    %445 = vmatprep.subr.bf16.mxu0 0
    %446 = vmatpush2.bf16.msra.mxu0 0
    %447 = vmatprep.subr.bf16.mxu0 0
    %448 = vmatpush2.bf16.msra.mxu0 0
    %449 = vmatprep.subr.bf16.mxu0 0
    %450 = vmatpush2.bf16.msra.mxu0 0
    %451 = vmatprep.subr.bf16.mxu0 0
    %452 = vmatpush2.bf16.msra.mxu0 0
    %453 = vmatprep.subr.bf16.mxu0 0
    %454 = vmatpush2.bf16.msra.mxu0 0
    %455 = vmatprep.subr.bf16.mxu0 0
    %456 = vmatpush2.bf16.msra.mxu0 0
    %457 = vmatprep.subr.bf16.mxu0 0
    %458 = vmatpush2.bf16.msra.mxu0 0
    %459 = vmatprep.subr.bf16.mxu0 0
    %460 = vmatpush2.bf16.msra.mxu0 0
    %461 = vmatprep.mubr.bf16.mxu0 0
    %462 = vmatmul.mubr.bf16.gmra.mxu0 %v427
    %v463 = vpop.f32.mrf.mxu0
    %v464 = vadd.f32 0.0, %v463
    %v465 = vpop.f32.mrf.mxu0
    %v466 = vpop.f32.mrf.mxu0
    %v467 = vpop.f32.mrf.mxu0
    %468 = vdwg.mxu0
    %v469 = vadd.f32 %v156, %v464
    %v470 = vtanh.pop %v469
    %472 = vrot.lane.b32.xlu0 %v470, 32
    %v473 = vpop.permute.xlu0 %472
    %475 = vst.msk [vmem:[#allocation2 + $0x8] sm:$0xff] %vm272, %v473
    %v476 = vpack.c.bf16 %v470, %v470
    %v478 = vsel %vm175, %v476, 0
    %480 = vmatprep.subr.bf16.mxu0 0
    %481 = vmatpush1.bf16.msra.mxu0 0
    %482 = vmatprep.subr.bf16.mxu0 0
    %483 = vmatpush1.bf16.msra.mxu0 0
    %484 = vmatprep.subr.bf16.mxu0 0
    %485 = vmatpush1.bf16.msra.mxu0 0
    %486 = vmatprep.subr.bf16.mxu0 0
    %487 = vmatpush1.bf16.msra.mxu0 0
    %488 = vmatprep.subr.bf16.mxu0 0
    %489 = vmatpush1.bf16.msra.mxu0 0
    %490 = vmatprep.subr.bf16.mxu0 0
    %491 = vmatpush1.bf16.msra.mxu0 0
    %492 = vmatprep.subr.bf16.mxu0 0
    %493 = vmatpush1.bf16.msra.mxu0 %v174
    %494 = vmatprep.subr.bf16.mxu0 0
    %495 = vmatpush1.bf16.msra.mxu0 %v173
    %496 = vmatprep.subr.bf16.mxu0 0
    %497 = vmatpush2.bf16.msra.mxu0 0
    %498 = vmatprep.subr.bf16.mxu0 0
    %499 = vmatpush2.bf16.msra.mxu0 0
    %500 = vmatprep.subr.bf16.mxu0 0
    %501 = vmatpush2.bf16.msra.mxu0 0
    %502 = vmatprep.subr.bf16.mxu0 0
    %503 = vmatpush2.bf16.msra.mxu0 0
    %504 = vmatprep.subr.bf16.mxu0 0
    %505 = vmatpush2.bf16.msra.mxu0 0
    %506 = vmatprep.subr.bf16.mxu0 0
    %507 = vmatpush2.bf16.msra.mxu0 0
    %508 = vmatprep.subr.bf16.mxu0 0
    %509 = vmatpush2.bf16.msra.mxu0 0
    %510 = vmatprep.subr.bf16.mxu0 0
    %511 = vmatpush2.bf16.msra.mxu0 0
    %512 = vmatprep.mubr.bf16.mxu0 0
    %513 = vmatmul.mubr.bf16.gmra.mxu0 %v478
    %v514 = vpop.f32.mrf.mxu0
    %v515 = vadd.f32 0.0, %v514
    %v516 = vpop.f32.mrf.mxu0
    %v517 = vpop.f32.mrf.mxu0
    %v518 = vpop.f32.mrf.mxu0
    %519 = vdwg.mxu0
    %v520 = vadd.f32 %v161, %v515
    %v521 = vtanh.pop %v520
    %523 = vrot.lane.b32.xlu0 %v521, 64
    %v524 = vpop.permute.xlu0 %523
    %526 = vst.msk [vmem:[#allocation2 + $0x8] sm:$0xff] %vm324, %v524
    %v527 = vpack.c.bf16 %v521, %v521
    %v529 = vsel %vm175, %v527, 0
    %531 = vmatprep.subr.bf16.mxu0 0
    %532 = vmatpush1.bf16.msra.mxu0 0
    %533 = vmatprep.subr.bf16.mxu0 0
    %534 = vmatpush1.bf16.msra.mxu0 0
    %535 = vmatprep.subr.bf16.mxu0 0
    %536 = vmatpush1.bf16.msra.mxu0 0
    %537 = vmatprep.subr.bf16.mxu0 0
    %538 = vmatpush1.bf16.msra.mxu0 0
    %539 = vmatprep.subr.bf16.mxu0 0
    %540 = vmatpush1.bf16.msra.mxu0 0
    %541 = vmatprep.subr.bf16.mxu0 0
    %542 = vmatpush1.bf16.msra.mxu0 0
    %543 = vmatprep.subr.bf16.mxu0 0
    %544 = vmatpush1.bf16.msra.mxu0 %v174
    %545 = vmatprep.subr.bf16.mxu0 0
    %546 = vmatpush1.bf16.msra.mxu0 %v173
    %547 = vmatprep.subr.bf16.mxu0 0
    %548 = vmatpush2.bf16.msra.mxu0 0
    %549 = vmatprep.subr.bf16.mxu0 0
    %550 = vmatpush2.bf16.msra.mxu0 0
    %551 = vmatprep.subr.bf16.mxu0 0
    %552 = vmatpush2.bf16.msra.mxu0 0
    %553 = vmatprep.subr.bf16.mxu0 0
    %554 = vmatpush2.bf16.msra.mxu0 0
    %555 = vmatprep.subr.bf16.mxu0 0
    %556 = vmatpush2.bf16.msra.mxu0 0
    %557 = vmatprep.subr.bf16.mxu0 0
    %558 = vmatpush2.bf16.msra.mxu0 0
    %559 = vmatprep.subr.bf16.mxu0 0
    %560 = vmatpush2.bf16.msra.mxu0 0
    %561 = vmatprep.subr.bf16.mxu0 0
    %562 = vmatpush2.bf16.msra.mxu0 0
    %563 = vmatprep.mubr.bf16.mxu0 0
    %564 = vmatmul.mubr.bf16.gmra.mxu0 %v529
    %v565 = vpop.f32.mrf.mxu0
    %v566 = vadd.f32 0.0, %v565
    %v567 = vpop.f32.mrf.mxu0
    %v568 = vpop.f32.mrf.mxu0
    %v569 = vpop.f32.mrf.mxu0
    %570 = vdwg.mxu0
    %v571 = vadd.f32 %v166, %v566
    %v572 = vtanh.pop %v571
    %574 = vrot.lane.b32.xlu0 %v572, 96
    %v575 = vpop.permute.xlu0 %574
    %577 = vst.msk [vmem:[#allocation2 + $0x8] sm:$0xff] %vm376, %v575
    // Predicated region
    $region18: #{tpu_custom_call.1} parent=1 // pred_check
      _
    $region19: #{tpu_custom_call.1} parent=1 // pred_check_branch
      %579 = sbr.rel (0) target = $region21
    $region20: #{tpu_custom_call.1} parent=1 // pred_region
      %s581 = ssub.s32 256, 256
      %582 = vsyncadd [#allocation3], %s581
      %s584 = sshll.u32 [#allocation2], 4
      %s585 = int_to_ptr.vmem [resolvable:$true] %s584
      %587 = dma.vmem_to_hbm [thread:$0]  %s585, 256, %s4, [#allocation3]
    $region21: #{tpu_custom_call.1} parent=1 // pred_fallthru
      _
    // Predicated region
    $region22: #{tpu_custom_call.1} parent=1 // pred_check
      _
    $region23: #{tpu_custom_call.1} parent=1 // pred_check_branch
      %589 = sbr.rel (0) target = $region25
    $region24: #{tpu_custom_call.1} parent=1 // pred_region
      %590 = dma.done [#allocation3], 256
    $region25: #{tpu_custom_call.1} parent=1 // pred_fallthru
      _
    %591 = vsyncpa [#allocation3], 1

</llo_original>
